<compile_context>
chip_gen: v6e
topology: v6e:2x2x1
jax: 0.10.0
libtpu: 0.0.40
codegen_flags: <defaults>
</compile_context>

<pallas_src>
import functools
import math

import jax
import jax.numpy as jnp
from jax.experimental import pallas as pl
from jax.experimental.pallas import tpu as pltpu


_INV_SQRT2 = 1.0 / math.sqrt(2.0)


def _erf_poly(z):
    # Abramowitz & Stegun 7.1.26 (|abs err| <= 1.5e-7): uses only exp/abs/where,
    # which always lower in Mosaic (keeps lax.erf out of the kernel).
    p = 0.3275911
    a1, a2, a3, a4, a5 = (0.254829592, -0.284496736, 1.421413741,
                          -1.453152027, 1.061405429)
    sgn = jnp.where(z >= 0.0, 1.0, -1.0)
    za = jnp.abs(z)
    t = 1.0 / (1.0 + p * za)
    poly = t * (a1 + t * (a2 + t * (a3 + t * (a4 + t * a5))))
    return sgn * (1.0 - poly * jnp.exp(-za * za))


def _gelu_exact(x):
    # PyTorch nn.GELU() default = exact (erf-based) GELU.
    return 0.5 * x * (1.0 + _erf_poly(x * _INV_SQRT2))


def _channel_attention_kernel(x_ref, w1_ref, b1_ref, w2_ref, b2_ref, o_ref,
                              *, inv_hw, nb, hidden, use_mxu):
    # Load in the caller's dtype, do all math in f32 (safe on v5e: no bf16 VALU).
    x = x_ref[...].astype(jnp.float32)                     # (nb, C, HW)

    # Pooling over HW.  The block's last dim is the full logical HW extent, so
    # Mosaic masks its own lane padding with the reduction identity (-inf / 0).
    x_max = jnp.max(x, axis=-1)                            # (nb, C)
    x_mean = jnp.sum(x, axis=-1) * inv_hw                  # (nb, C)
    pooled = jnp.concatenate([x_max, x_mean], axis=0)      # (2*nb, C), lane-dense

    b1 = b1_ref[...]                                       # (1, hidden)
    if use_mxu:
        # Fused lane-dense MLP over both pooled stats: w1_ref = w1.T (C, hidden),
        # w2_ref = w2.T (hidden, C).
        h = jnp.dot(pooled, w1_ref[...],
                    preferred_element_type=jnp.float32) + b1          # (2nb, hid)
        h = _gelu_exact(h)
        y = jnp.dot(h, w2_ref[...],
                    preferred_element_type=jnp.float32) + b2_ref[...]  # (2nb, C)
    else:
        # Tiny C / hidden: skip the MXU entirely.  Unrolled VPU broadcast
        # multiply-adds + lane reductions; w1_ref = w1 (hidden, C),
        # w2_ref = w2.T (hidden, C) so every row is lane-dense in C.
        w1 = w1_ref[...]
        w2t = w2_ref[...]
        y = None
        for j in range(hidden):
            hj = jnp.sum(pooled * w1[j:j + 1, :], axis=-1, keepdims=True)
            hj = _gelu_exact(hj + b1[:, j:j + 1])          # (2nb, 1)
            contrib = hj * w2t[j:j + 1, :]                 # (2nb, C)
            y = contrib if y is None else y + contrib
        y = y + b2_ref[...]

    gate = jax.nn.sigmoid(y[:nb] + y[nb:])                 # (nb, C)
    o_ref[...] = (x * gate[:, :, None]).astype(o_ref.dtype)


def channel_attention(x_nchw, w1, b1, w2, b2):
    """x_nchw: (N, C, H, W).  w1: (hidden, C), b1: (hidden,), w2: (C, hidden),
    b2: (C,).  Returns sigmoid(MLP(max) + MLP(mean)) * x, same shape & dtype."""
    n, c, h, w = x_nchw.shape
    hw = h * w
    hidden = int(w1.shape[0])
    assert int(w1.shape[1]) == c and int(w2.shape[0]) == c and int(w2.shape[1]) == hidden

    # Metadata-only view; keep the caller's dtype (no extra HBM cast pass).
    x_flat = x_nchw.reshape(n, c, hw)

    # Generation-aware VMEM budgeting (v5e/v6e: 128 MiB, v7x: 64 MiB per TC).
    try:
        vmem_cap = int(pltpu.get_tpu_info().vmem_capacity_bytes)
    except Exception:  # conservative fallback if the query is unavailable
        vmem_cap = 64 << 20
    if vmem_cap >= (128 << 20):
        block_budget, vmem_limit, bufs = 60 << 20, 96 << 20, 7   # allows Buffered(3) input
    else:
        block_budget, vmem_limit, bufs = 26 << 20, 56 << 20, 6   # v7x-safe

    # Batch tile sizing: biggest tile within the budget (in/out double buffers +
    # in-kernel f32 temporaries), then cap for >= 4 grid steps when N allows
    # (>= 2 steps per v7x TensorCore keeps the DMA pipeline in steady state).
    block_bytes_f32 = c * hw * 4
    nb = max(1, block_budget // (bufs * block_bytes_f32))
    nb = min(nb, n)
    if n >= 4:
        nb = min(nb, pl.cdiv(n, 4))
    elif n >= 2:
        nb = min(nb, pl.cdiv(n, 2))
    # Prefer an Nb that divides N exactly (no ragged final block) unless that
    # would shrink the tile by more than 2x; otherwise rely on Pallas' OOB
    # masking for the ragged final block (no padded HBM copy either way).
    nb_div = next((d for d in range(nb, max(nb // 2, 1) - 1, -1) if n % d == 0), None)
    if nb_div is not None:
        nb = nb_div
    steps = pl.cdiv(n, nb)
    # TODO(synk): for very large C*HW where even nb=1 exceeds the VMEM budget,
    # add an HW-tiled two-pass path (pool pass accumulating max/sum in scratch
    # over an "arbitrary" HW grid axis, then an apply pass that rescales x).
    need_bytes = bufs * nb * block_bytes_f32 + (2 << 20)
    vmem_limit = max(vmem_limit, min(need_bytes, int(vmem_cap * 0.9)))

    # MLP path selection + lane-dense weight orientation.
    use_mxu = (hidden > 16) or (c >= 128)
    if use_mxu:
        w1_arg = jnp.asarray(w1, jnp.float32).T            # (C, hidden)
    else:
        w1_arg = jnp.asarray(w1, jnp.float32)              # (hidden, C)
    w2_arg = jnp.asarray(w2, jnp.float32).T                # (hidden, C)
    b1_row = jnp.asarray(b1, jnp.float32).reshape(1, hidden)
    b2_row = jnp.asarray(b2, jnp.float32).reshape(1, c)

    kernel = functools.partial(_channel_attention_kernel,
                               inv_hw=1.0 / hw, nb=nb, hidden=hidden,
                               use_mxu=use_mxu)

    def full(shape):
        return pl.BlockSpec(shape, lambda i: (0,) * len(shape))

    x_spec_kwargs = {}
    if vmem_cap >= (128 << 20) and steps >= 4:
        # Pure-bandwidth kernel on 128 MiB parts: a 3rd input buffer keeps the
        # DMA engine busy across the output writeback (skip on v7x: VMEM-tight).
        x_spec_kwargs["pipeline_mode"] = pl.Buffered(3)
    x_spec = pl.BlockSpec((nb, c, hw), lambda i: (i, 0, 0), **x_spec_kwargs)

    out = pl.pallas_call(
        kernel,
        out_shape=jax.ShapeDtypeStruct((n, c, hw), x_flat.dtype),
        grid=(steps,),
        in_specs=[
            x_spec,
            full(tuple(w1_arg.shape)),
            full((1, hidden)),
            full(tuple(w2_arg.shape)),
            full((1, c)),
        ],
        out_specs=pl.BlockSpec((nb, c, hw), lambda i: (i, 0, 0)),
        compiler_params=pltpu.CompilerParams(
            dimension_semantics=("parallel",),
            vmem_limit_bytes=int(vmem_limit),
        ),
    )(x_flat, w1_arg, b1_row, w2_arg, b2_row)

    return out.reshape(n, c, h, w)


def _reference(x, w1, b1, w2, b2):
    # Pure-JAX reference of the PyTorch forward (1x1 convs == matmuls, exact GELU).
    xf = x.astype(jnp.float32)
    x_max = jnp.max(xf, axis=(2, 3))     # (N, C)
    x_mean = jnp.mean(xf, axis=(2, 3))   # (N, C)

    def mlp(v):
        hh = v @ w1.T + b1
        hh = 0.5 * hh * (1.0 + jax.lax.erf(hh * _INV_SQRT2))
        return hh @ w2.T + b2

    gate = jax.nn.sigmoid(mlp(x_max) + mlp(x_mean))        # (N, C)
    return xf * gate[:, :, None, None]


if __name__ == "__main__":
    # Module config: input_channels=4, ratio=2 -> hidden=2.
    N, C, H, W = 2, 4, 16, 16
    RATIO = 2
    HIDDEN = C // RATIO

    key = jax.random.PRNGKey(0)
    kx, k1, k2, k3, k4, kx2, kx3 = jax.random.split(key, 7)

    x = jax.random.normal(kx, (N, C, H, W), dtype=jnp.float32)
    # Deterministic synthetic Conv2d(1x1) parameters (weights squeezed to 2-D).
    w1 = jax.random.normal(k1, (HIDDEN, C), dtype=jnp.float32) * 0.5   # conv1 weight
    b1 = jax.random.normal(k2, (HIDDEN,), dtype=jnp.float32) * 0.1     # conv1 bias
    w2 = jax.random.normal(k3, (C, HIDDEN), dtype=jnp.float32) * 0.5   # conv2 weight
    b2 = jax.random.normal(k4, (C,), dtype=jnp.float32) * 0.1          # conv2 bias

    out = jax.block_until_ready(channel_attention(x, w1, b1, w2, b2))
    ref = _reference(x, w1, b1, w2, b2)
    assert out.shape == (N, C, H, W) and out.dtype == x.dtype
    assert jnp.allclose(out, ref, atol=1e-4, rtol=1e-4), "mismatch vs reference"

    # Odd spatial size (HW=25, not 128-aligned -> Mosaic lane padding) and odd
    # batch (N=3 -> non-trivial batch tiling), with no HBM padding anywhere.
    x2 = jax.random.normal(kx2, (3, C, 5, 5), dtype=jnp.float32)
    out2 = jax.block_until_ready(channel_attention(x2, w1, b1, w2, b2))
    ref2 = _reference(x2, w1, b1, w2, b2)
    assert out2.shape == x2.shape
    assert jnp.allclose(out2, ref2, atol=1e-4, rtol=1e-4), "mismatch (odd HW / batch)"

    # bf16 I/O path: bf16 stays bf16 in HBM (halves traffic on this mem-bound op),
    # math runs in f32 in-kernel, output stored back as bf16.
    x3 = jax.random.normal(kx3, (N, C, H, W), dtype=jnp.float32).astype(jnp.bfloat16)
    out3 = jax.block_until_ready(channel_attention(x3, w1, b1, w2, b2))
    ref3 = _reference(x3, w1, b1, w2, b2)
    assert out3.dtype == jnp.bfloat16
    assert jnp.allclose(out3.astype(jnp.float32), ref3, atol=2e-2, rtol=2e-2), "mismatch (bf16)"

    print("KERNEL_OK")
</pallas_src>

<mosaic_0001>
module attributes {stable_mosaic.version = 11 : i64} {
  func.func @_channel_attention_kernel(%arg0: i32, %arg1: memref<1x4x256xf32, #tpu.memory_space<vmem>>, %arg2: memref<2x4xf32, #tpu.memory_space<vmem>>, %arg3: memref<1x2xf32, #tpu.memory_space<vmem>>, %arg4: memref<2x4xf32, #tpu.memory_space<vmem>>, %arg5: memref<1x4xf32, #tpu.memory_space<vmem>>, %arg6: memref<1x4x256xf32, #tpu.memory_space<vmem>>) attributes {dimension_semantics = [#tpu.dimension_semantics<parallel>], iteration_bounds = array<i64: 2>, scalar_prefetch = 0 : i64, scratch_operands = 0 : i64, tpu.core_type = #tpu.core_type<tc>, window_params = [{transform_indices = @transform_0, window_bounds = array<i64: 1, 4, 256>}, {pipeline_mode = #tpu.pipeline_mode<synchronous>, transform_indices = @transform_1, window_bounds = array<i64: 2, 4>}, {pipeline_mode = #tpu.pipeline_mode<synchronous>, transform_indices = @transform_2, window_bounds = array<i64: 1, 2>}, {pipeline_mode = #tpu.pipeline_mode<synchronous>, transform_indices = @transform_3, window_bounds = array<i64: 2, 4>}, {pipeline_mode = #tpu.pipeline_mode<synchronous>, transform_indices = @transform_4, window_bounds = array<i64: 1, 4>}, {transform_indices = @transform_5, window_bounds = array<i64: 1, 4, 256>}]} {
    %c0 = arith.constant 0 : index
    %c0_0 = arith.constant 0 : index
    %c0_1 = arith.constant 0 : index
    %0 = vector.load %arg1[%c0, %c0_0, %c0_1] : memref<1x4x256xf32, #tpu.memory_space<vmem>>, vector<1x4x256xf32>
    %cst = arith.constant dense<0xFF800000> : vector<1x4xf32>
    %1 = vector.multi_reduction <maximumf>, %0, %cst [2] : vector<1x4x256xf32> to vector<1x4xf32>
    %cst_2 = arith.constant dense<0.000000e+00> : vector<1x4xf32>
    %2 = vector.multi_reduction <add>, %0, %cst_2 [2] : vector<1x4x256xf32> to vector<1x4xf32>
    %cst_3 = arith.constant 3.906250e-03 : f32
    %3 = vector.broadcast %cst_3 : f32 to vector<1x4xf32>
    %4 = arith.mulf %2, %3 : vector<1x4xf32>
    %5 = tpu.concatenate %1, %4 in 0 : vector<1x4xf32>, vector<1x4xf32> -> vector<2x4xf32>
    %c0_4 = arith.constant 0 : index
    %c0_5 = arith.constant 0 : index
    %6 = vector.load %arg3[%c0_4, %c0_5] : memref<1x2xf32, #tpu.memory_space<vmem>>, vector<1x2xf32>
    %c0_6 = arith.constant 0 : index
    %c0_7 = arith.constant 0 : index
    %7 = vector.load %arg2[%c0_6, %c0_7] : memref<2x4xf32, #tpu.memory_space<vmem>>, vector<2x4xf32>
    %c0_8 = arith.constant 0 : index
    %c0_9 = arith.constant 0 : index
    %8 = vector.load %arg4[%c0_8, %c0_9] : memref<2x4xf32, #tpu.memory_space<vmem>>, vector<2x4xf32>
    %9 = vector.extract_strided_slice %7 {offsets = [0, 0], sizes = [1, 4], strides = [1, 1]} : vector<2x4xf32> to vector<1x4xf32>
    %10 = vector.broadcast %9 : vector<1x4xf32> to vector<2x4xf32>
    %11 = arith.mulf %5, %10 : vector<2x4xf32>
    %cst_10 = arith.constant dense<0.000000e+00> : vector<2xf32>
    %12 = vector.multi_reduction <add>, %11, %cst_10 [1] : vector<2x4xf32> to vector<2xf32>
    %13 = vector.shape_cast %12 : vector<2xf32> to vector<2x1xf32>
    %14 = vector.extract_strided_slice %6 {offsets = [0, 0], sizes = [1, 1], strides = [1, 1]} : vector<1x2xf32> to vector<1x1xf32>
    %15 = vector.broadcast %14 : vector<1x1xf32> to vector<2x1xf32>
    %16 = arith.addf %13, %15 : vector<2x1xf32>
    %cst_11 = arith.constant 5.000000e-01 : f32
    %17 = vector.broadcast %cst_11 : f32 to vector<2x1xf32>
    %18 = arith.mulf %17, %16 : vector<2x1xf32>
    %cst_12 = arith.constant 0.707106769 : f32
    %19 = vector.broadcast %cst_12 : f32 to vector<2x1xf32>
    %20 = arith.mulf %16, %19 : vector<2x1xf32>
    %cst_13 = arith.constant 0.000000e+00 : f32
    %21 = vector.broadcast %cst_13 : f32 to vector<2x1xf32>
    %22 = arith.cmpf oge, %20, %21 : vector<2x1xf32>
    %cst_14 = arith.constant 1.000000e+00 : f32
    %cst_15 = arith.constant -1.000000e+00 : f32
    %23 = vector.broadcast %cst_14 : f32 to vector<2x1xf32>
    %24 = vector.broadcast %cst_15 : f32 to vector<2x1xf32>
    %25 = arith.select %22, %23, %24 : vector<2x1xi1>, vector<2x1xf32>
    %26 = math.absf %20 : vector<2x1xf32>
    %cst_16 = arith.constant 0.327591091 : f32
    %27 = vector.broadcast %cst_16 : f32 to vector<2x1xf32>
    %28 = arith.mulf %27, %26 : vector<2x1xf32>
    %cst_17 = arith.constant 1.000000e+00 : f32
    %29 = vector.broadcast %cst_17 : f32 to vector<2x1xf32>
    %30 = arith.addf %29, %28 : vector<2x1xf32>
    %cst_18 = arith.constant 1.000000e+00 : f32
    %31 = vector.broadcast %cst_18 : f32 to vector<2x1xf32>
    %32 = arith.divf %31, %30 : vector<2x1xf32>
    %cst_19 = arith.constant 1.06140542 : f32
    %33 = vector.broadcast %cst_19 : f32 to vector<2x1xf32>
    %34 = arith.mulf %32, %33 : vector<2x1xf32>
    %cst_20 = arith.constant -1.45315206 : f32
    %35 = vector.broadcast %cst_20 : f32 to vector<2x1xf32>
    %36 = arith.addf %35, %34 : vector<2x1xf32>
    %37 = arith.mulf %32, %36 : vector<2x1xf32>
    %cst_21 = arith.constant 1.42141378 : f32
    %38 = vector.broadcast %cst_21 : f32 to vector<2x1xf32>
    %39 = arith.addf %38, %37 : vector<2x1xf32>
    %40 = arith.mulf %32, %39 : vector<2x1xf32>
    %cst_22 = arith.constant -0.284496725 : f32
    %41 = vector.broadcast %cst_22 : f32 to vector<2x1xf32>
    %42 = arith.addf %41, %40 : vector<2x1xf32>
    %43 = arith.mulf %32, %42 : vector<2x1xf32>
    %cst_23 = arith.constant 0.254829586 : f32
    %44 = vector.broadcast %cst_23 : f32 to vector<2x1xf32>
    %45 = arith.addf %44, %43 : vector<2x1xf32>
    %46 = arith.mulf %32, %45 : vector<2x1xf32>
    %cst_24 = arith.constant 0.000000e+00 : f32
    %47 = vector.broadcast %cst_24 : f32 to vector<2x1xf32>
    %48 = arith.subf %47, %26 : vector<2x1xf32>
    %49 = arith.mulf %48, %26 : vector<2x1xf32>
    %50 = math.exp %49 : vector<2x1xf32>
    %51 = arith.mulf %46, %50 : vector<2x1xf32>
    %cst_25 = arith.constant 1.000000e+00 : f32
    %52 = vector.broadcast %cst_25 : f32 to vector<2x1xf32>
    %53 = arith.subf %52, %51 : vector<2x1xf32>
    %54 = arith.mulf %25, %53 : vector<2x1xf32>
    %cst_26 = arith.constant 1.000000e+00 : f32
    %55 = vector.broadcast %cst_26 : f32 to vector<2x1xf32>
    %56 = arith.addf %55, %54 : vector<2x1xf32>
    %57 = arith.mulf %18, %56 : vector<2x1xf32>
    %58 = vector.extract_strided_slice %8 {offsets = [0, 0], sizes = [1, 4], strides = [1, 1]} : vector<2x4xf32> to vector<1x4xf32>
    %59 = vector.broadcast %57 : vector<2x1xf32> to vector<2x4xf32>
    %60 = vector.broadcast %58 : vector<1x4xf32> to vector<2x4xf32>
    %61 = arith.mulf %59, %60 : vector<2x4xf32>
    %62 = vector.extract_strided_slice %7 {offsets = [1, 0], sizes = [1, 4], strides = [1, 1]} : vector<2x4xf32> to vector<1x4xf32>
    %63 = vector.broadcast %62 : vector<1x4xf32> to vector<2x4xf32>
    %64 = arith.mulf %5, %63 : vector<2x4xf32>
    %cst_27 = arith.constant dense<0.000000e+00> : vector<2xf32>
    %65 = vector.multi_reduction <add>, %64, %cst_27 [1] : vector<2x4xf32> to vector<2xf32>
    %66 = vector.shape_cast %65 : vector<2xf32> to vector<2x1xf32>
    %67 = vector.extract_strided_slice %6 {offsets = [0, 1], sizes = [1, 1], strides = [1, 1]} : vector<1x2xf32> to vector<1x1xf32>
    %68 = vector.broadcast %67 : vector<1x1xf32> to vector<2x1xf32>
    %69 = arith.addf %66, %68 : vector<2x1xf32>
    %cst_28 = arith.constant 5.000000e-01 : f32
    %70 = vector.broadcast %cst_28 : f32 to vector<2x1xf32>
    %71 = arith.mulf %70, %69 : vector<2x1xf32>
    %cst_29 = arith.constant 0.707106769 : f32
    %72 = vector.broadcast %cst_29 : f32 to vector<2x1xf32>
    %73 = arith.mulf %69, %72 : vector<2x1xf32>
    %cst_30 = arith.constant 0.000000e+00 : f32
    %74 = vector.broadcast %cst_30 : f32 to vector<2x1xf32>
    %75 = arith.cmpf oge, %73, %74 : vector<2x1xf32>
    %cst_31 = arith.constant 1.000000e+00 : f32
    %cst_32 = arith.constant -1.000000e+00 : f32
    %76 = vector.broadcast %cst_31 : f32 to vector<2x1xf32>
    %77 = vector.broadcast %cst_32 : f32 to vector<2x1xf32>
    %78 = arith.select %75, %76, %77 : vector<2x1xi1>, vector<2x1xf32>
    %79 = math.absf %73 : vector<2x1xf32>
    %cst_33 = arith.constant 0.327591091 : f32
    %80 = vector.broadcast %cst_33 : f32 to vector<2x1xf32>
    %81 = arith.mulf %80, %79 : vector<2x1xf32>
    %cst_34 = arith.constant 1.000000e+00 : f32
    %82 = vector.broadcast %cst_34 : f32 to vector<2x1xf32>
    %83 = arith.addf %82, %81 : vector<2x1xf32>
    %cst_35 = arith.constant 1.000000e+00 : f32
    %84 = vector.broadcast %cst_35 : f32 to vector<2x1xf32>
    %85 = arith.divf %84, %83 : vector<2x1xf32>
    %cst_36 = arith.constant 1.06140542 : f32
    %86 = vector.broadcast %cst_36 : f32 to vector<2x1xf32>
    %87 = arith.mulf %85, %86 : vector<2x1xf32>
    %cst_37 = arith.constant -1.45315206 : f32
    %88 = vector.broadcast %cst_37 : f32 to vector<2x1xf32>
    %89 = arith.addf %88, %87 : vector<2x1xf32>
    %90 = arith.mulf %85, %89 : vector<2x1xf32>
    %cst_38 = arith.constant 1.42141378 : f32
    %91 = vector.broadcast %cst_38 : f32 to vector<2x1xf32>
    %92 = arith.addf %91, %90 : vector<2x1xf32>
    %93 = arith.mulf %85, %92 : vector<2x1xf32>
    %cst_39 = arith.constant -0.284496725 : f32
    %94 = vector.broadcast %cst_39 : f32 to vector<2x1xf32>
    %95 = arith.addf %94, %93 : vector<2x1xf32>
    %96 = arith.mulf %85, %95 : vector<2x1xf32>
    %cst_40 = arith.constant 0.254829586 : f32
    %97 = vector.broadcast %cst_40 : f32 to vector<2x1xf32>
    %98 = arith.addf %97, %96 : vector<2x1xf32>
    %99 = arith.mulf %85, %98 : vector<2x1xf32>
    %cst_41 = arith.constant 0.000000e+00 : f32
    %100 = vector.broadcast %cst_41 : f32 to vector<2x1xf32>
    %101 = arith.subf %100, %79 : vector<2x1xf32>
    %102 = arith.mulf %101, %79 : vector<2x1xf32>
    %103 = math.exp %102 : vector<2x1xf32>
    %104 = arith.mulf %99, %103 : vector<2x1xf32>
    %cst_42 = arith.constant 1.000000e+00 : f32
    %105 = vector.broadcast %cst_42 : f32 to vector<2x1xf32>
    %106 = arith.subf %105, %104 : vector<2x1xf32>
    %107 = arith.mulf %78, %106 : vector<2x1xf32>
    %cst_43 = arith.constant 1.000000e+00 : f32
    %108 = vector.broadcast %cst_43 : f32 to vector<2x1xf32>
    %109 = arith.addf %108, %107 : vector<2x1xf32>
    %110 = arith.mulf %71, %109 : vector<2x1xf32>
    %111 = vector.extract_strided_slice %8 {offsets = [1, 0], sizes = [1, 4], strides = [1, 1]} : vector<2x4xf32> to vector<1x4xf32>
    %112 = vector.broadcast %110 : vector<2x1xf32> to vector<2x4xf32>
    %113 = vector.broadcast %111 : vector<1x4xf32> to vector<2x4xf32>
    %114 = arith.mulf %112, %113 : vector<2x4xf32>
    %115 = arith.addf %61, %114 : vector<2x4xf32>
    %c0_44 = arith.constant 0 : index
    %c0_45 = arith.constant 0 : index
    %116 = vector.load %arg5[%c0_44, %c0_45] : memref<1x4xf32, #tpu.memory_space<vmem>>, vector<1x4xf32>
    %117 = vector.broadcast %116 : vector<1x4xf32> to vector<2x4xf32>
    %118 = arith.addf %115, %117 : vector<2x4xf32>
    %119 = vector.extract_strided_slice %118 {offsets = [0, 0], sizes = [1, 4], strides = [1, 1]} : vector<2x4xf32> to vector<1x4xf32>
    %120 = vector.extract_strided_slice %118 {offsets = [1, 0], sizes = [1, 4], strides = [1, 1]} : vector<2x4xf32> to vector<1x4xf32>
    %121 = arith.addf %119, %120 : vector<1x4xf32>
    %122 = arith.negf %121 : vector<1x4xf32>
    %123 = math.exp %122 : vector<1x4xf32>
    %cst_46 = arith.constant 1.000000e+00 : f32
    %124 = vector.broadcast %cst_46 : f32 to vector<1x4xf32>
    %125 = arith.addf %124, %123 : vector<1x4xf32>
    %126 = arith.divf %124, %125 : vector<1x4xf32>
    %127 = vector.shape_cast %126 : vector<1x4xf32> to vector<1x4x1xf32>
    %128 = vector.broadcast %127 : vector<1x4x1xf32> to vector<1x4x256xf32>
    %129 = arith.mulf %0, %128 : vector<1x4x256xf32>
    %c0_47 = arith.constant 0 : index
    %c0_48 = arith.constant 0 : index
    %c0_49 = arith.constant 0 : index
    %130 = vector.load %arg6[%c0_47, %c0_48, %c0_49] : memref<1x4x256xf32, #tpu.memory_space<vmem>>, vector<1x4x256xf32>
    tpu.vector_store %arg6[%c0_47, %c0_48, %c0_49], %129 {strides = array<i32>} : memref<1x4x256xf32, #tpu.memory_space<vmem>>, vector<1x4x256xf32>,
    return
  }
  func.func @transform_0(%arg0: i32) -> (i32, i32, i32) {
    %c0_i32 = arith.constant 0 : i32
    %c0_i32_0 = arith.constant 0 : i32
    %c0_i32_1 = arith.constant 0 : i32
    return %arg0, %c0_i32, %c0_i32_0 : i32, i32, i32
  }
  func.func @transform_1(%arg0: i32) -> (i32, i32) {
    %c0_i32 = arith.constant 0 : i32
    %c0_i32_0 = arith.constant 0 : i32
    %c0_i32_1 = arith.constant 0 : i32
    return %c0_i32, %c0_i32_0 : i32, i32
  }
  func.func @transform_2(%arg0: i32) -> (i32, i32) {
    %c0_i32 = arith.constant 0 : i32
    %c0_i32_0 = arith.constant 0 : i32
    %c0_i32_1 = arith.constant 0 : i32
    return %c0_i32, %c0_i32_0 : i32, i32
  }
  func.func @transform_3(%arg0: i32) -> (i32, i32) {
    %c0_i32 = arith.constant 0 : i32
    %c0_i32_0 = arith.constant 0 : i32
    %c0_i32_1 = arith.constant 0 : i32
    return %c0_i32, %c0_i32_0 : i32, i32
  }
  func.func @transform_4(%arg0: i32) -> (i32, i32) {
    %c0_i32 = arith.constant 0 : i32
    %c0_i32_0 = arith.constant 0 : i32
    %c0_i32_1 = arith.constant 0 : i32
    return %c0_i32, %c0_i32_0 : i32, i32
  }
  func.func @transform_5(%arg0: i32) -> (i32, i32, i32) {
    %c0_i32 = arith.constant 0 : i32
    %c0_i32_0 = arith.constant 0 : i32
    %c0_i32_1 = arith.constant 0 : i32
    return %arg0, %c0_i32, %c0_i32_0 : i32, i32, i32
  }
}

</mosaic_0001>

<llo_original>
// kernel: tpu_custom_call.1
$region0: #{tpu_custom_call.1}
  #allocation0 [shape = 'u32[]', space=smem, size = 0x4, offset = 0x4, fixed_abs, tag = 'smem constant byte address 0x4 - core index']
  #allocation1 [shape = 'u32[144,128]{1,0:T(1,128)}', space=vmem, size = 0x12000, scoped, tag = 'internal scratch']
  %s0 = inlined_call_operand.hbm [shape: f32[2,4,256], index: 0, kind: input, shape index: {}]
  %s1 = inlined_call_operand.hbm [shape: f32[2,4], index: 1, kind: input, shape index: {}]
  %s2 = inlined_call_operand.vmem [shape: f32[1,2], index: 2, kind: input, shape index: {}]
  %s3 = inlined_call_operand.vmem [shape: f32[2,4], index: 3, kind: input, shape index: {}]
  %s4 = inlined_call_operand.vmem [shape: f32[1,4], index: 4, kind: input, shape index: {}]
  %s5 = inlined_call_operand.hbm [shape: f32[2,4,256], index: 5, kind: output, shape index: {}]
  %s6 = sld [smem:[#allocation0]]
  $region61: #{tpu_custom_call.1} parent=0
    _
  %s8 = ssub.s32 1, %s6
  %s9 = scalar_select 0, %s8, %s6
  $region1: #{tpu_custom_call.1} parent=0
    #allocation2 [shape = 'u8[8192]{0}', space=vmem, size = 0x2000, scoped, tag = 'input window, operand 0']
    #allocation3 [shape = 's32[2]{0}', space=sflag, size = 0x8, scoped, tag = 'scoped memory for tpu_custom_call.1']
    #allocation4 [shape = 's32[2]{0}', space=sflag, size = 0x8, scoped, tag = 'scoped memory for tpu_custom_call.1']
    #allocation5 [shape = 'u8[1024]{0}', space=vmem, size = 0x400, scoped, tag = 'input window, operand 1, single buffered']
    #allocation6 [shape = 's32[1]{0}', space=sflag, size = 0x4, scoped, tag = 'scoped memory for tpu_custom_call.1']
    #allocation7 [shape = 'u8[8192]{0}', space=vmem, size = 0x2000, scoped, tag = 'output window, operand 0']
    %10 = vsyncpa [#allocation3], 0
    %s11 = scalar_lea.sflag [#allocation3], 1
    %12 = vsyncpa %s11, 0
    %13 = vsyncpa [#allocation6], 0
    %14 = vsyncpa [#allocation4], 0
    %s15 = scalar_lea.sflag [#allocation4], 1
    %16 = vsyncpa %s15, 0
    loop: start=0, step=1, limit=4
    $region2: #{tpu_custom_call.1} parent=1 // loop_pre_header
      _
    $region3: #{tpu_custom_call.1} parent=1 // loop_header
      %s18 = sphi 0, %s22
      %p19 = scmp.ge.s32.totalorder %s18, 4
      %s28 = sphi 0, %s30
      %s31 = sphi 0, %s28
      %s32 = sphi 0, %s31
      %s48 = sphi 0, %s32
      %s52 = sphi 0, %s52
      %s54 = sphi 0, %s52
      %s55 = sphi 0, %s54
      %s69 = sphi 0, %s55
      %s73 = sphi 0, %s73
      %s75 = sphi 0, %s73
      %s76 = sphi 0, %s75
      %s90 = sphi 0, %s76
      %s94 = sphi 0, %s94
      %s96 = sphi 0, %s94
      %s97 = sphi 0, %s96
      %s111 = sphi 0, %s97
      %s115 = sphi 0, %s115
      %s117 = sphi 0, %s115
      %s118 = sphi 0, %s117
      %s132 = sphi 0, %s118
      %s138 = sphi 0, %s140
      %s141 = sphi 0, %s138
      %s142 = sphi 0, %s141
      %s158 = sphi 0, %s142
    $region4: #{tpu_custom_call.1} parent=1 // loop_header_branch
      %21 = sbr.rel (%p19) target = $region8
    $region5: #{tpu_custom_call.1} parent=1 // loop_body
      %s23 = ssub.s32 %s18, 1
      %s24 = ssub.s32 %s18, 2
      %s25 = sadd.s32 %s18, 1
      %s26 = ssub.s32 %s18, %s25
      %p27 = scmp.eq.s32.totalorder %s26, 0
      %s29 = sadd.s32 %s28, 1
      %s30 = scalar_select %p27, %s28, %s29
      %p33 = pneg %p27
      %p34 = scmp.eq.s32.totalorder %s18, 1
      %p35 = por %p33, %p34
      %p36 = scmp.ne.s32.totalorder %s28, %s31
      %p37 = scmp.eq.s32.totalorder %s18, 0
      %p38 = por %p36, %p37
      %p39 = scmp.ne.s32.totalorder %s28, %s31
      %p40 = scmp.eq.s32.totalorder %s23, 1
      %p41 = por %p39, %p40
      %p42 = scmp.ne.s32.totalorder %s31, %s32
      %p43 = scmp.eq.s32.totalorder %s23, 0
      %p44 = por %p42, %p43
      %p45 = scmp.ne.s32.totalorder %s31, %s32
      %p46 = scmp.eq.s32.totalorder %s24, 1
      %p47 = por %p45, %p46
      %p49 = scmp.ne.s32.totalorder %s32, %s48
      %p50 = scmp.eq.s32.totalorder %s24, 0
      %p51 = por %p49, %p50
      %s53 = sadd.s32 %s52, 1
      %p56 = scmp.eq.s32.totalorder %s18, 1
      %p57 = scmp.ne.s32.totalorder %s52, %s54
      %p58 = scmp.eq.s32.totalorder %s18, 0
      %p59 = por %p57, %p58
      %p60 = scmp.ne.s32.totalorder %s52, %s54
      %p61 = scmp.eq.s32.totalorder %s23, 1
      %p62 = por %p60, %p61
      %p63 = scmp.ne.s32.totalorder %s54, %s55
      %p64 = scmp.eq.s32.totalorder %s23, 0
      %p65 = por %p63, %p64
      %p66 = scmp.ne.s32.totalorder %s54, %s55
      %p67 = scmp.eq.s32.totalorder %s24, 1
      %p68 = por %p66, %p67
      %p70 = scmp.ne.s32.totalorder %s55, %s69
      %p71 = scmp.eq.s32.totalorder %s24, 0
      %p72 = por %p70, %p71
      %s74 = sadd.s32 %s73, 1
      %p77 = scmp.eq.s32.totalorder %s18, 1
      %p78 = scmp.ne.s32.totalorder %s73, %s75
      %p79 = scmp.eq.s32.totalorder %s18, 0
      %p80 = por %p78, %p79
      %p81 = scmp.ne.s32.totalorder %s73, %s75
      %p82 = scmp.eq.s32.totalorder %s23, 1
      %p83 = por %p81, %p82
      %p84 = scmp.ne.s32.totalorder %s75, %s76
      %p85 = scmp.eq.s32.totalorder %s23, 0
      %p86 = por %p84, %p85
      %p87 = scmp.ne.s32.totalorder %s75, %s76
      %p88 = scmp.eq.s32.totalorder %s24, 1
      %p89 = por %p87, %p88
      %p91 = scmp.ne.s32.totalorder %s76, %s90
      %p92 = scmp.eq.s32.totalorder %s24, 0
      %p93 = por %p91, %p92
      %s95 = sadd.s32 %s94, 1
      %p98 = scmp.eq.s32.totalorder %s18, 1
      %p99 = scmp.ne.s32.totalorder %s94, %s96
      %p100 = scmp.eq.s32.totalorder %s18, 0
      %p101 = por %p99, %p100
      %p102 = scmp.ne.s32.totalorder %s94, %s96
      %p103 = scmp.eq.s32.totalorder %s23, 1
      %p104 = por %p102, %p103
      %p105 = scmp.ne.s32.totalorder %s96, %s97
      %p106 = scmp.eq.s32.totalorder %s23, 0
      %p107 = por %p105, %p106
      %p108 = scmp.ne.s32.totalorder %s96, %s97
      %p109 = scmp.eq.s32.totalorder %s24, 1
      %p110 = por %p108, %p109
      %p112 = scmp.ne.s32.totalorder %s97, %s111
      %p113 = scmp.eq.s32.totalorder %s24, 0
      %p114 = por %p112, %p113
      %s116 = sadd.s32 %s115, 1
      %p119 = scmp.eq.s32.totalorder %s18, 1
      %p120 = scmp.ne.s32.totalorder %s115, %s117
      %p121 = scmp.eq.s32.totalorder %s18, 0
      %p122 = por %p120, %p121
      %p123 = scmp.ne.s32.totalorder %s115, %s117
      %p124 = scmp.eq.s32.totalorder %s23, 1
      %p125 = por %p123, %p124
      %p126 = scmp.ne.s32.totalorder %s117, %s118
      %p127 = scmp.eq.s32.totalorder %s23, 0
      %p128 = por %p126, %p127
      %p129 = scmp.ne.s32.totalorder %s117, %s118
      %p130 = scmp.eq.s32.totalorder %s24, 1
      %p131 = por %p129, %p130
      %p133 = scmp.ne.s32.totalorder %s118, %s132
      %p134 = scmp.eq.s32.totalorder %s24, 0
      %p135 = por %p133, %p134
      %s136 = ssub.s32 %s18, %s25
      %p137 = scmp.eq.s32.totalorder %s136, 0
      %s139 = sadd.s32 %s138, 1
      %s140 = scalar_select %p137, %s138, %s139
      %p143 = pneg %p137
      %p144 = scmp.eq.s32.totalorder %s18, 1
      %p145 = por %p143, %p144
      %p146 = scmp.ne.s32.totalorder %s138, %s141
      %p147 = scmp.eq.s32.totalorder %s18, 0
      %p148 = por %p146, %p147
      %p149 = scmp.ne.s32.totalorder %s138, %s141
      %p150 = scmp.eq.s32.totalorder %s23, 1
      %p151 = por %p149, %p150
      %p152 = scmp.ne.s32.totalorder %s141, %s142
      %p153 = scmp.eq.s32.totalorder %s23, 0
      %p154 = por %p152, %p153
      %p155 = scmp.ne.s32.totalorder %s141, %s142
      %p156 = scmp.eq.s32.totalorder %s24, 1
      %p157 = por %p155, %p156
      %p159 = scmp.ne.s32.totalorder %s142, %s158
      %p160 = scmp.eq.s32.totalorder %s24, 0
      %p161 = por %p159, %p160
      %p162 = scmp.le.s32.totalorder 1, %s18
      %p163 = scmp.lt.s32.totalorder %s18, 3
      %p164 = pnand %p162, %p163
      %p165 = pneg %p164
      // Predicated region
      $region9: #{tpu_custom_call.1} parent=5 // pred_check
        _
      $region10: #{tpu_custom_call.1} parent=5 // pred_check_branch
        %167 = sbr.rel (%p164) target = $region12
      $region11: #{tpu_custom_call.1} parent=5 // pred_region
        %s168 = ssub.s32 %s18, 1
        // Predicated region
        $region13: #{tpu_custom_call.1} parent=11 // pred_check
          %p169 = pneg %p65
        $region14: #{tpu_custom_call.1} parent=11 // pred_check_branch
          %171 = sbr.rel (%p169) target = $region16
        $region15: #{tpu_custom_call.1} parent=11 // pred_region
          %s173 = ssub.s32 32, 32
          %174 = vsyncadd [#allocation6], %s173
          %s176 = sshll.u32 [#allocation5], 4
          %s177 = int_to_ptr.vmem [resolvable:$true] %s176
          %179 = dma.hbm_to_vmem [thread:$0]  %s1, 32, %s177, [#allocation6]
        $region16: #{tpu_custom_call.1} parent=11 // pred_fallthru
          _
        // Predicated region
        $region17: #{tpu_custom_call.1} parent=11 // pred_check
          %p180 = pneg %p86
        $region18: #{tpu_custom_call.1} parent=11 // pred_check_branch
          %182 = sbr.rel (%p180) target = $region20
        $region19: #{tpu_custom_call.1} parent=11 // pred_region
          _
        $region20: #{tpu_custom_call.1} parent=11 // pred_fallthru
          _
        // Predicated region
        $region21: #{tpu_custom_call.1} parent=11 // pred_check
          %p183 = pneg %p107
        $region22: #{tpu_custom_call.1} parent=11 // pred_check_branch
          %185 = sbr.rel (%p183) target = $region24
        $region23: #{tpu_custom_call.1} parent=11 // pred_region
          _
        $region24: #{tpu_custom_call.1} parent=11 // pred_fallthru
          _
        // Predicated region
        $region25: #{tpu_custom_call.1} parent=11 // pred_check
          %p186 = pneg %p128
        $region26: #{tpu_custom_call.1} parent=11 // pred_check_branch
          %188 = sbr.rel (%p186) target = $region28
        $region27: #{tpu_custom_call.1} parent=11 // pred_region
          _
        $region28: #{tpu_custom_call.1} parent=11 // pred_fallthru
          _
      $region12: #{tpu_custom_call.1} parent=5 // pred_fallthru
        _
      %p189 = scmp.lt.s32.totalorder %s18, 2
      // Predicated region
      $region29: #{tpu_custom_call.1} parent=5 // pred_check
        %p190 = pneg %p189
      $region30: #{tpu_custom_call.1} parent=5 // pred_check_branch
        %192 = sbr.rel (%p190) target = $region32
      $region31: #{tpu_custom_call.1} parent=5 // pred_region
        // Predicated region
        $region33: #{tpu_custom_call.1} parent=31 // pred_check
          %p193 = pneg %p38
        $region34: #{tpu_custom_call.1} parent=31 // pred_check_branch
          %195 = sbr.rel (%p193) target = $region36
        $region35: #{tpu_custom_call.1} parent=31 // pred_region
          %s196 = sand.u32 %s28, 1
          %s197 = scalar_lea.sflag [#allocation3], %s196
          %s198 = sand.u32 %s28, 1
          %s199 = smul.addr %s198, 8
          %s200 = scalar_lea.vmem [#allocation2], %s199
          %s202 = ssub.s32 128, 128
          %203 = vsyncadd %s197, %s202
          %s204 = smul.addr %s18, 2
          %s205 = smul.addr %s204, 64
          %s206 = scalar_lea.hbm %s0, %s205
          %s208 = sshll.u32 %s200, 4
          %s209 = int_to_ptr.vmem [resolvable:$true] %s208
          %211 = dma.hbm_to_vmem [thread:$0]  %s206, 128, %s209, %s197
        $region36: #{tpu_custom_call.1} parent=31 // pred_fallthru
          _
      $region32: #{tpu_custom_call.1} parent=5 // pred_fallthru
        _
      %p212 = scmp.le.s32.totalorder 1, %s18
      %p213 = scmp.lt.s32.totalorder %s18, 3
      %p214 = pnand %p212, %p213
      %p215 = pneg %p214
      // Predicated region
      $region37: #{tpu_custom_call.1} parent=5 // pred_check
        _
      $region38: #{tpu_custom_call.1} parent=5 // pred_check_branch
        %217 = sbr.rel (%p214) target = $region40
      $region39: #{tpu_custom_call.1} parent=5 // pred_region
        %s218 = ssub.s32 %s18, 1
        %s219 = sand.u32 %s31, 1
        %s220 = scalar_lea.sflag [#allocation3], %s219
        %s221 = sand.u32 %s31, 1
        %s222 = smul.addr %s221, 8
        %s223 = scalar_lea.vmem [#allocation2], %s222
        // Predicated region
        $region41: #{tpu_custom_call.1} parent=39 // pred_check
          %p224 = pneg %p44
        $region42: #{tpu_custom_call.1} parent=39 // pred_check_branch
          %226 = sbr.rel (%p224) target = $region44
        $region43: #{tpu_custom_call.1} parent=39 // pred_region
          %227 = dma.done %s220, 128
        $region44: #{tpu_custom_call.1} parent=39 // pred_fallthru
          _
        // Predicated region
        $region45: #{tpu_custom_call.1} parent=39 // pred_check
          %p228 = pneg %p65
        $region46: #{tpu_custom_call.1} parent=39 // pred_check_branch
          %230 = sbr.rel (%p228) target = $region48
        $region47: #{tpu_custom_call.1} parent=39 // pred_region
          %231 = dma.done [#allocation6], 32
        $region48: #{tpu_custom_call.1} parent=39 // pred_fallthru
          _
        %s232 = sand.u32 %s31, 1
        %s233 = scalar_lea.sflag [#allocation3], %s232
        %s234 = sand.u32 %s31, 1
        %s235 = smul.addr %s234, 8
        %s236 = scalar_lea.vmem [#allocation2], %s235
        %p237 = pneg %p44
        %p238 = pneg %p41
        %p239 = pneg %p65
        %p240 = pneg %p62
        %p241 = pneg %p86
        %p242 = pneg %p83
        %p243 = pneg %p107
        %p244 = pneg %p104
        %p245 = pneg %p128
        %p246 = pneg %p125
        %p247 = pneg %p154
        %p248 = pneg %p151
        %s249 = sand.u32 %s141, 1
        %s250 = scalar_lea.sflag [#allocation4], %s249
        %s251 = sand.u32 %s141, 1
        %s252 = smul.addr %s251, 8
        %s253 = scalar_lea.vmem [#allocation7], %s252
        %v254 = vld [vmem:[%s223] sm:$0xff]
        %v256 = vcombine.high %v254, %v254
        %vm258 = vcmask 1043456
        %v259 = vsel %vm258, %v254, -inf
        %v260 = vsel %vm258, %v256, -inf
        %v261 = vmax.f32 %v259, %v260
        %262 = vmax.xlane.f32.xlu0 %v261
        %v263 = vpop.xlane.xlu0 %262
        %v264 = vsel %vm258, %v254, 0.0
        %v265 = vsel %vm258, %v256, 0.0
        %v266 = vadd.f32 %v264, %v265
        %267 = vadd.xlane.f32.xlu0 %v266
        %v268 = vpop.xlane.xlu0 %267
        %v269 = vmul.f32 %v268, 0.00390625
        %v271 = vlaneseq
        %v272 = vand.u32 %v271, 127
        %v273 = vlaneseq
        %v274 = vshrl.u32 %v273, 7
        %v275 = vsub.s32 %v272, %v274
        %v276 = vrot.slane %v263, %v275
        %v279 = vlaneseq
        %v280 = vshrl.u32 %v279, 7
        %v281 = vsub.s32 %v272, %v280
        %v282 = vrot.slane %v269, %v281
        %vm284 = vcmask 1040384
        %v285 = vsel %vm284, %v276, %v282
        %v286 = vld [vmem:[%s2] sm:$0x1]
        %v287 = vld [vmem:[#allocation5] sm:$0x3]
        %v288 = vld [vmem:[%s3] sm:$0x3]
        %v289 = vlaneseq
        %v290 = vshrl.u32 %v289, 7
        %v291 = vsub.s32 0, %v290
        %v292 = vrot.slane %v287, %v291
        %v293 = vmul.f32 %v285, %v292
        %vm294 = vcmask 25600
        %v295 = vsel %vm294, %v293, 0.0
        %296 = vadd.xlane.f32.xlu0 %v295
        %v297 = vpop.xlane.xlu0 %296
        %v299 = vlaneseq
        %v300 = vshrl.u32 %v299, 7
        %v301 = vsub.s32 0, %v300
        %v302 = vrot.slane %v286, %v301
        %v304 = vadd.f32 %v297, %v302
        %v305 = vmul.f32 %v304, 0.5
        %v306 = vmul.f32 %v304, 0.70710677
        %vm307 = vcmp.ge.f32.partialorder %v306, 0.0
        %v308 = vsel %vm307, 1.0, -1.0
        %v309 = vand.u32 2147483647, %v306
        %v310 = vmul.f32 %v309, 0.3275911
        %v311 = vadd.f32 %v310, 1.0
        %v312 = vrcp.pop %v311
        %v313 = vmul.f32 1.0, %v312
        %v314 = vmul.f32 %v313, 1.0614054
        %v315 = vadd.f32 %v314, -1.4531521
        %v316 = vmul.f32 %v313, %v315
        %v317 = vadd.f32 %v316, 1.4214138
        %v318 = vmul.f32 %v313, %v317
        %v319 = vadd.f32 %v318, -0.28449672
        %v320 = vmul.f32 %v313, %v319
        %v321 = vadd.f32 %v320, 0.2548296
        %v322 = vmul.f32 %v313, %v321
        %v323 = vsub.f32 0.0, %v309
        %v324 = vmul.f32 %v323, %v309
        %v325 = vmul.f32 %v324, 1.442695
        %v326 = vpow.pop %v325
        %v327 = vmul.f32 %v322, %v326
        %v328 = vsub.f32 1.0, %v327
        %v329 = vmul.f32 %v308, %v328
        %v330 = vadd.f32 %v329, 1.0
        %v331 = vmul.f32 %v305, %v330
        %333 = vset.pattern.permute.xlu0 0
        %334 = vperm.xlu0 %333, %v331
        %v335 = vpop.permute.xlu0 %334
        %v337 = vlaneseq
        %v338 = vshrl.u32 %v337, 7
        %v339 = vsub.s32 0, %v338
        %v340 = vrot.slane %v288, %v339
        %v341 = vmul.f32 %v335, %v340
        %v342 = vlaneseq
        %v343 = vshrl.u32 %v342, 7
        %v344 = vsub.s32 1, %v343
        %v345 = vrot.slane %v287, %v344
        %v346 = vmul.f32 %v285, %v345
        %v347 = vsel %vm294, %v346, 0.0
        %348 = vadd.xlane.f32.xlu0 %v347
        %v349 = vpop.xlane.xlu0 %348
        %v350 = vadd.f32 %v349, %v302
        %v351 = vmul.f32 %v350, 0.5
        %v352 = vmul.f32 %v350, 0.70710677
        %vm353 = vcmp.ge.f32.partialorder %v352, 0.0
        %v354 = vsel %vm353, 1.0, -1.0
        %v355 = vand.u32 2147483647, %v352
        %v356 = vmul.f32 %v355, 0.3275911
        %v357 = vadd.f32 %v356, 1.0
        %v358 = vrcp.pop %v357
        %v359 = vmul.f32 1.0, %v358
        %v360 = vmul.f32 %v359, 1.0614054
        %v361 = vadd.f32 %v360, -1.4531521
        %v362 = vmul.f32 %v359, %v361
        %v363 = vadd.f32 %v362, 1.4214138
        %v364 = vmul.f32 %v359, %v363
        %v365 = vadd.f32 %v364, -0.28449672
        %v366 = vmul.f32 %v359, %v365
        %v367 = vadd.f32 %v366, 0.2548296
        %v368 = vmul.f32 %v359, %v367
        %v369 = vsub.f32 0.0, %v355
        %v370 = vmul.f32 %v369, %v355
        %v371 = vmul.f32 %v370, 1.442695
        %v372 = vpow.pop %v371
        %v373 = vmul.f32 %v368, %v372
        %v374 = vsub.f32 1.0, %v373
        %v375 = vmul.f32 %v354, %v374
        %v376 = vadd.f32 %v375, 1.0
        %v377 = vmul.f32 %v351, %v376
        %379 = vset.pattern.permute.xlu0 1
        %380 = vperm.xlu0 %379, %v377
        %v381 = vpop.permute.xlu0 %380
        %v383 = vlaneseq
        %v384 = vshrl.u32 %v383, 7
        %v385 = vsub.s32 1, %v384
        %v386 = vrot.slane %v288, %v385
        %v387 = vmul.f32 %v381, %v386
        %v388 = vadd.f32 %v341, %v387
        %v389 = vld [vmem:[%s4] sm:$0x1]
        %v391 = vlaneseq
        %v392 = vshrl.u32 %v391, 7
        %v393 = vsub.s32 0, %v392
        %v394 = vrot.slane %v389, %v393
        %v396 = vadd.f32 %v388, %v394
        %v398 = vrot.slane %v396, 1
        %v400 = vadd.f32 %v396, %v398
        %v401 = vxor.u32 %v400, 2147483648
        %v402 = vmul.f32 %v401, 1.442695
        %v403 = vpow.pop %v402
        %v404 = vadd.f32 %v403, 1.0
        %v405 = vrcp.pop %v404
        %v406 = vmul.f32 1.0, %v405
        %v407 = vlaneseq
        %v408 = vshrl.u32 %v407, 7
        %v409 = vsub.s32 0, %v408
        %v410 = vrot.slane %v406, %v409
        %412 = vbcast.lane.b32.xlu0 %v410, 256
        %v413 = vpop.permute.xlu0 %412
        %v416 = vunpack.c.l.s4 839922192
        %v417 = vunpack.c.0.s8 %v416
        %v418 = vlaneseq
        %v419 = vshrl.u32 %v418, 7
        %v420 = vsub.s32 %v417, %v419
        %v421 = vrot.slane %v413, %v420
        %v423 = vmul.f32 %v254, %v421
        %424 = vst [vmem:[%s253] sm:$0xff] %v423
        %s425 = sand.u32 %s141, 1
        %s426 = scalar_lea.sflag [#allocation4], %s425
        %s427 = sand.u32 %s141, 1
        %s428 = smul.addr %s427, 8
        %s429 = scalar_lea.vmem [#allocation7], %s428
        // Predicated region
        $region49: #{tpu_custom_call.1} parent=39 // pred_check
          %p430 = pneg %p151
        $region50: #{tpu_custom_call.1} parent=39 // pred_check_branch
          %432 = sbr.rel (%p430) target = $region52
        $region51: #{tpu_custom_call.1} parent=39 // pred_region
          %s434 = ssub.s32 128, 128
          %435 = vsyncadd %s426, %s434
          %s436 = smul.addr %s23, 2
          %s437 = smul.addr %s436, 64
          %s438 = scalar_lea.hbm %s5, %s437
          %s440 = sshll.u32 %s429, 4
          %s441 = int_to_ptr.vmem [resolvable:$true] %s440
          %443 = dma.vmem_to_hbm [thread:$0]  %s441, 128, %s438, %s426
        $region52: #{tpu_custom_call.1} parent=39 // pred_fallthru
          _
      $region40: #{tpu_custom_call.1} parent=5 // pred_fallthru
        _
      %p444 = scmp.le.s32.totalorder 2, %s18
      // Predicated region
      $region53: #{tpu_custom_call.1} parent=5 // pred_check
        %p445 = pneg %p444
      $region54: #{tpu_custom_call.1} parent=5 // pred_check_branch
        %447 = sbr.rel (%p445) target = $region56
      $region55: #{tpu_custom_call.1} parent=5 // pred_region
        %s448 = ssub.s32 %s18, 2
        // Predicated region
        $region57: #{tpu_custom_call.1} parent=55 // pred_check
          %p449 = pneg %p157
        $region58: #{tpu_custom_call.1} parent=55 // pred_check_branch
          %451 = sbr.rel (%p449) target = $region60
        $region59: #{tpu_custom_call.1} parent=55 // pred_region
          %s452 = sand.u32 %s142, 1
          %s453 = scalar_lea.sflag [#allocation4], %s452
          %s454 = sand.u32 %s142, 1
          %s455 = smul.addr %s454, 8
          %s456 = scalar_lea.vmem [#allocation7], %s455
          %457 = dma.done %s453, 128
        $region60: #{tpu_custom_call.1} parent=55 // pred_fallthru
          _
      $region56: #{tpu_custom_call.1} parent=5 // pred_fallthru
        _
    $region6: #{tpu_custom_call.1} parent=1 // loop_footer
      %s22 = sadd.s32 1, %s18
    $region7: #{tpu_custom_call.1} parent=1 // loop_footer_branch
      %17 = sbr.rel target = $region3
    $region8: #{tpu_custom_call.1} parent=1 // loop_exit
      _
    %458 = vsyncpa [#allocation3], 1
    %s459 = scalar_lea.sflag [#allocation3], 1
    %460 = vsyncpa %s459, 1
    %461 = vsyncpa [#allocation6], 1
    %462 = vsyncpa [#allocation4], 1
    %s463 = scalar_lea.sflag [#allocation4], 1
    %464 = vsyncpa %s463, 1

</llo_original>
